<compile_context>
chip_gen: v6e
topology: v6e:2x2x1
jax: 0.10.0
libtpu: 0.0.40
codegen_flags: <defaults>
</compile_context>

<pallas_src>
import jax
import jax.numpy as jnp
from jax.experimental import pallas as pl
from jax.experimental.pallas import tpu as pltpu

DIM_IN = 4              # dim_in (channels of the 1D sequence)
DIM_MODEL = 32          # dim_model
MAX_TOKEN_LENGTH = 16   # max_token_length
LN_EPS = 1e-5           # torch nn.LayerNorm default
TILE_S_MAX = 1024       # rows per grid step (multiple of 8 sublanes)


def _round_up(x, m):
    return ((x + m - 1) // m) * m


# ------------------------------ Pallas kernels --------------------------------
def _ln_head(h, head_w, head_b):
    """LayerNorm (affine folded into head_w / head_b) + bias-free head Linear."""
    mean = jnp.mean(h, axis=-1, keepdims=True)
    hc = h - mean
    var = jnp.mean(hc * hc, axis=-1, keepdims=True)
    hn = hc * jax.lax.rsqrt(var + LN_EPS)
    return jnp.dot(hn, head_w, preferred_element_type=jnp.float32) + head_b


def _ct_kernel(x_ref, pos_ref, w_x_ref, head_w_ref, head_b_ref, out_ref):
    """x_self_cond is None path: cat(zeros, x) @ W_emb == x @ W_emb[dim_in:]."""
    h = jnp.dot(x_ref[0], w_x_ref[...], preferred_element_type=jnp.float32)
    h = h + pos_ref[...]           # pos_eff already carries the emb bias
    # dropout: identity at inference; backbone: identity (see TODO above).
    out_ref[0] = _ln_head(h, head_w_ref[...], head_b_ref[...])


def _ct_kernel_sc(x_ref, xsc_ref, pos_ref, w_x_ref, w_sc_ref,
                  head_w_ref, head_b_ref, out_ref):
    """General path with an explicit x_self_cond stream (weight-split concat)."""
    h = jnp.dot(x_ref[0], w_x_ref[...], preferred_element_type=jnp.float32)
    h = h + jnp.dot(xsc_ref[0], w_sc_ref[...], preferred_element_type=jnp.float32)
    h = h + pos_ref[...]
    out_ref[0] = _ln_head(h, head_w_ref[...], head_b_ref[...])


# ------------------------------ wrapper ---------------------------------------
def forward(params, x, x_self_cond=None, timestep=None):
    """x: float32 [B, S, dim_in]. Returns {'outputs': float32 [B, S, dim_in]}."""
    del timestep  # only consumed by the injected backbone (identity here)
    B, S, C = x.shape
    D = params["emb_w"].shape[1]

    tile_s = min(TILE_S_MAX, _round_up(S, 8))
    s_pad = _round_up(S, tile_s)
    n_s_tiles = s_pad // tile_s
    pad_s = s_pad - S

    x_p = jnp.pad(x, ((0, 0), (0, pad_s), (0, 0))) if pad_s else x

    # Fold the emb bias into the positional embedding slice (both [_, D]):
    #   x @ Wx + b + pos  ==  x @ Wx + (pos + b)
    pos_eff = params["pos_emb"][:S] + params["emb_b"]
    pos_p = jnp.pad(pos_eff, ((0, pad_s), (0, 0))) if pad_s else pos_eff

    # Fold the LayerNorm affine into the head Linear:
    #   ((h-m)*r * g + b) @ Wh  ==  ((h-m)*r) @ (g^T * Wh) + b @ Wh
    head_w_eff = params["ln_g"].reshape(D, 1) * params["head_w"]   # [D, C]
    head_b_eff = params["ln_b"] @ params["head_w"]                 # [1, C]

    emb_w = params["emb_w"]                   # [2*C, D], rows = cat(x_self_cond, x)
    w_sc, w_x = emb_w[:C], emb_w[C:]

    tok_spec = pl.BlockSpec((1, tile_s, C), lambda b, s: (b, s, 0))
    pos_spec = pl.BlockSpec((tile_s, D), lambda b, s: (s, 0))
    out_spec = pl.BlockSpec((1, tile_s, C), lambda b, s: (b, s, 0))

    def const_spec(shape):
        return pl.BlockSpec(shape, lambda b, s: (0, 0))

    n_tok = B * s_pad
    flops = 2 * n_tok * C * D + 2 * n_tok * D * C
    bytes_accessed = 4 * (x_p.size + pos_p.size + n_tok * C
                          + emb_w.size + D * C + C)
    if x_self_cond is not None:
        flops += 2 * n_tok * C * D
        bytes_accessed += 4 * x_p.size

    common = dict(
        out_shape=jax.ShapeDtypeStruct((B, s_pad, C), jnp.float32),
        grid=(B, n_s_tiles),
        out_specs=out_spec,
        compiler_params=pltpu.CompilerParams(
            dimension_semantics=("parallel", "parallel"),
            vmem_limit_bytes=16 * 1024 * 1024,
        ),
        cost_estimate=pl.CostEstimate(flops=flops, transcendentals=0,
                                      bytes_accessed=bytes_accessed),
    )

    if x_self_cond is None:
        out = pl.pallas_call(
            _ct_kernel,
            in_specs=[tok_spec, pos_spec,
                      const_spec((C, D)),
                      const_spec((D, C)), const_spec((1, C))],
            **common,
        )(x_p, pos_p, w_x, head_w_eff, head_b_eff)
    else:
        xsc_p = (jnp.pad(x_self_cond, ((0, 0), (0, pad_s), (0, 0)))
                 if pad_s else x_self_cond)
        out = pl.pallas_call(
            _ct_kernel_sc,
            in_specs=[tok_spec, tok_spec, pos_spec,
                      const_spec((C, D)), const_spec((C, D)),
                      const_spec((D, C)), const_spec((1, C))],
            **common,
        )(x_p, xsc_p, pos_p, w_x, w_sc, head_w_eff, head_b_eff)

    if pad_s:
        out = out[:, :S]
    return {"outputs": out}


# ------------------------------ params / reference ----------------------------
def init_params(key, dim_in=DIM_IN, dim_model=DIM_MODEL,
                max_token_length=MAX_TOKEN_LENGTH):
    ks = jax.random.split(key, 4)

    def rnd(k, shape, scale=0.05):
        return (jax.random.normal(k, shape, jnp.float32) * scale).astype(jnp.float32)

    return {
        "emb_w": rnd(ks[0], (2 * dim_in, dim_model)),
        "emb_b": rnd(ks[1], (1, dim_model)),
        "pos_emb": jax.random.uniform(ks[2], (max_token_length, dim_model),
                                      dtype=jnp.float32),   # torch.rand init
        "ln_g": jnp.ones((1, dim_model), jnp.float32),
        "ln_b": jnp.zeros((1, dim_model), jnp.float32),
        "head_w": rnd(ks[3], (dim_model, dim_in)),
    }


def forward_ref(params, x, x_self_cond=None, timestep=None):
    """Pure-JAX reference mirroring the PyTorch forward (identity backbone)."""
    B, S, C = x.shape
    if x_self_cond is None:
        x_self_cond = jnp.zeros_like(x)
    xc = jnp.concatenate([x_self_cond, x], axis=-1)
    h = xc @ params["emb_w"] + params["emb_b"]
    h = h + params["pos_emb"][:S][None]
    mean = h.mean(-1, keepdims=True)
    var = ((h - mean) ** 2).mean(-1, keepdims=True)
    hn = (h - mean) / jnp.sqrt(var + LN_EPS) * params["ln_g"] + params["ln_b"]
    return hn @ params["head_w"]


if __name__ == "__main__":
    key = jax.random.PRNGKey(0)
    pkey, xkey, sckey = jax.random.split(key, 3)
    params = init_params(pkey)

    B, S = 2, 8
    x = jax.random.normal(xkey, (B, S, DIM_IN), jnp.float32)
    timestep = jnp.arange(B, dtype=jnp.float32)   # only feeds the (identity) backbone

    # Path 1: x_self_cond is None (zeros in the reference module)
    out = forward(params, x, x_self_cond=None, timestep=timestep)
    y = jax.block_until_ready(out["outputs"])
    ref = forward_ref(params, x, None, timestep)
    assert y.shape == (B, S, DIM_IN)
    assert jnp.allclose(y, ref, atol=1e-4, rtol=1e-4), "mismatch (no self-cond)"

    # Path 2: explicit x_self_cond
    xsc = jax.random.normal(sckey, (B, S, DIM_IN), jnp.float32)
    out2 = forward(params, x, x_self_cond=xsc, timestep=timestep)
    y2 = jax.block_until_ready(out2["outputs"])
    ref2 = forward_ref(params, x, xsc, timestep)
    assert jnp.allclose(y2, ref2, atol=1e-4, rtol=1e-4), "mismatch (self-cond)"

    print("KERNEL_OK")
</pallas_src>

<mosaic_0001>
module attributes {stable_mosaic.version = 11 : i64} {
  func.func @_ct_kernel(%arg0: i32, %arg1: i32, %arg2: memref<1x8x4xf32, #tpu.memory_space<vmem>>, %arg3: memref<8x32xf32, #tpu.memory_space<vmem>>, %arg4: memref<4x32xf32, #tpu.memory_space<vmem>>, %arg5: memref<32x4xf32, #tpu.memory_space<vmem>>, %arg6: memref<1x4xf32, #tpu.memory_space<vmem>>, %arg7: memref<1x8x4xf32, #tpu.memory_space<vmem>>) attributes {dimension_semantics = [#tpu.dimension_semantics<parallel>, #tpu.dimension_semantics<parallel>], iteration_bounds = array<i64: 2, 1>, scalar_prefetch = 0 : i64, scratch_operands = 0 : i64, tpu.core_type = #tpu.core_type<tc>, window_params = [{transform_indices = @transform_0, window_bounds = array<i64: 1, 8, 4>}, {transform_indices = @transform_1, window_bounds = array<i64: 8, 32>}, {pipeline_mode = #tpu.pipeline_mode<synchronous>, transform_indices = @transform_2, window_bounds = array<i64: 4, 32>}, {pipeline_mode = #tpu.pipeline_mode<synchronous>, transform_indices = @transform_3, window_bounds = array<i64: 32, 4>}, {pipeline_mode = #tpu.pipeline_mode<synchronous>, transform_indices = @transform_4, window_bounds = array<i64: 1, 4>}, {transform_indices = @transform_5, window_bounds = array<i64: 1, 8, 4>}]} {
    %c0 = arith.constant 0 : index
    %c0_0 = arith.constant 0 : index
    %c0_1 = arith.constant 0 : index
    %0 = vector.load %arg2[%c0, %c0_0, %c0_1] : memref<1x8x4xf32, #tpu.memory_space<vmem>>, vector<1x8x4xf32>
    %1 = vector.shape_cast %0 : vector<1x8x4xf32> to vector<8x4xf32>
    %c0_2 = arith.constant 0 : index
    %c0_3 = arith.constant 0 : index
    %2 = vector.load %arg4[%c0_2, %c0_3] : memref<4x32xf32, #tpu.memory_space<vmem>>, vector<4x32xf32>
    %cst = arith.constant dense<0.000000e+00> : vector<8x32xf32>
    %3 = tpu.matmul %1, %2, %cst {dimension_numbers = #tpu.dot_dimension_numbers<[1], [0], [0], [1], [0, 0, 1, 1], [], []>} : vector<8x4xf32>, vector<4x32xf32>, vector<8x32xf32> -> vector<8x32xf32>
    %c0_4 = arith.constant 0 : index
    %c0_5 = arith.constant 0 : index
    %4 = vector.load %arg3[%c0_4, %c0_5] : memref<8x32xf32, #tpu.memory_space<vmem>>, vector<8x32xf32>
    %5 = arith.addf %3, %4 : vector<8x32xf32>
    %c0_6 = arith.constant 0 : index
    %c0_7 = arith.constant 0 : index
    %6 = vector.load %arg5[%c0_6, %c0_7] : memref<32x4xf32, #tpu.memory_space<vmem>>, vector<32x4xf32>
    %c0_8 = arith.constant 0 : index
    %c0_9 = arith.constant 0 : index
    %7 = vector.load %arg6[%c0_8, %c0_9] : memref<1x4xf32, #tpu.memory_space<vmem>>, vector<1x4xf32>
    %cst_10 = arith.constant dense<0.000000e+00> : vector<8xf32>
    %8 = vector.multi_reduction <add>, %5, %cst_10 [1] : vector<8x32xf32> to vector<8xf32>
    %9 = vector.shape_cast %8 : vector<8xf32> to vector<8x1xf32>
    %cst_11 = arith.constant 3.200000e+01 : f32
    %10 = vector.broadcast %cst_11 : f32 to vector<8x1xf32>
    %11 = arith.divf %9, %10 : vector<8x1xf32>
    %12 = vector.broadcast %11 : vector<8x1xf32> to vector<8x32xf32>
    %13 = arith.subf %5, %12 : vector<8x32xf32>
    %14 = arith.mulf %13, %13 : vector<8x32xf32>
    %cst_12 = arith.constant dense<0.000000e+00> : vector<8xf32>
    %15 = vector.multi_reduction <add>, %14, %cst_12 [1] : vector<8x32xf32> to vector<8xf32>
    %16 = vector.shape_cast %15 : vector<8xf32> to vector<8x1xf32>
    %cst_13 = arith.constant 3.200000e+01 : f32
    %17 = vector.broadcast %cst_13 : f32 to vector<8x1xf32>
    %18 = arith.divf %16, %17 : vector<8x1xf32>
    %cst_14 = arith.constant 9.99999974E-6 : f32
    %19 = vector.broadcast %cst_14 : f32 to vector<8x1xf32>
    %20 = arith.addf %18, %19 : vector<8x1xf32>
    %21 = math.rsqrt %20 : vector<8x1xf32>
    %22 = vector.broadcast %21 : vector<8x1xf32> to vector<8x32xf32>
    %23 = arith.mulf %13, %22 : vector<8x32xf32>
    %cst_15 = arith.constant dense<0.000000e+00> : vector<8x4xf32>
    %24 = tpu.matmul %23, %6, %cst_15 {dimension_numbers = #tpu.dot_dimension_numbers<[1], [0], [0], [1], [0, 0, 1, 1], [], []>} : vector<8x32xf32>, vector<32x4xf32>, vector<8x4xf32> -> vector<8x4xf32>
    %25 = vector.broadcast %7 : vector<1x4xf32> to vector<8x4xf32>
    %26 = arith.addf %24, %25 : vector<8x4xf32>
    %c0_16 = arith.constant 0 : index
    %c0_17 = arith.constant 0 : index
    %c0_18 = arith.constant 0 : index
    %27 = vector.load %arg7[%c0_16, %c0_17, %c0_18] : memref<1x8x4xf32, #tpu.memory_space<vmem>>, vector<1x8x4xf32>
    %28 = vector.shape_cast %27 : vector<1x8x4xf32> to vector<8x4xf32>
    %29 = vector.shape_cast %26 : vector<8x4xf32> to vector<1x8x4xf32>
    tpu.vector_store %arg7[%c0_16, %c0_17, %c0_18], %29 {strides = array<i32>} : memref<1x8x4xf32, #tpu.memory_space<vmem>>, vector<1x8x4xf32>,
    return
  }
  func.func @transform_0(%arg0: i32, %arg1: i32) -> (i32, i32, i32) {
    %c0_i32 = arith.constant 0 : i32
    %c0_i32_0 = arith.constant 0 : i32
    return %arg0, %arg1, %c0_i32 : i32, i32, i32
  }
  func.func @transform_1(%arg0: i32, %arg1: i32) -> (i32, i32) {
    %c0_i32 = arith.constant 0 : i32
    %c0_i32_0 = arith.constant 0 : i32
    return %arg1, %c0_i32 : i32, i32
  }
  func.func @transform_2(%arg0: i32, %arg1: i32) -> (i32, i32) {
    %c0_i32 = arith.constant 0 : i32
    %c0_i32_0 = arith.constant 0 : i32
    %c0_i32_1 = arith.constant 0 : i32
    return %c0_i32, %c0_i32_0 : i32, i32
  }
  func.func @transform_3(%arg0: i32, %arg1: i32) -> (i32, i32) {
    %c0_i32 = arith.constant 0 : i32
    %c0_i32_0 = arith.constant 0 : i32
    %c0_i32_1 = arith.constant 0 : i32
    return %c0_i32, %c0_i32_0 : i32, i32
  }
  func.func @transform_4(%arg0: i32, %arg1: i32) -> (i32, i32) {
    %c0_i32 = arith.constant 0 : i32
    %c0_i32_0 = arith.constant 0 : i32
    %c0_i32_1 = arith.constant 0 : i32
    return %c0_i32, %c0_i32_0 : i32, i32
  }
  func.func @transform_5(%arg0: i32, %arg1: i32) -> (i32, i32, i32) {
    %c0_i32 = arith.constant 0 : i32
    %c0_i32_0 = arith.constant 0 : i32
    return %arg0, %arg1, %c0_i32 : i32, i32, i32
  }
}

</mosaic_0001>

<llo_original>
// kernel: tpu_custom_call.1
$region0: #{tpu_custom_call.1}
  #allocation0 [shape = 'u32[]', space=smem, size = 0x4, offset = 0x4, fixed_abs, tag = 'smem constant byte address 0x4 - core index']
  #allocation1 [shape = 'u32[144,128]{1,0:T(1,128)}', space=vmem, size = 0x12000, scoped, tag = 'internal scratch']
  %s0 = inlined_call_operand.vmem [shape: f32[2,8,4], index: 0, kind: input, shape index: {}]
  %s1 = inlined_call_operand.vmem [shape: f32[8,32], index: 1, kind: input, shape index: {}]
  %s2 = inlined_call_operand.vmem [shape: f32[4,32], index: 2, kind: input, shape index: {}]
  %s3 = inlined_call_operand.vmem [shape: f32[32,4], index: 3, kind: input, shape index: {}]
  %s4 = inlined_call_operand.vmem [shape: f32[1,4], index: 4, kind: input, shape index: {}]
  %s5 = inlined_call_operand.vmem [shape: f32[2,8,4], index: 5, kind: output, shape index: {}]
  %s6 = sld [smem:[#allocation0]]
  $region53: #{tpu_custom_call.1} parent=0
    _
  %s8 = ssub.s32 1, %s6
  %s9 = scalar_select 0, %s8, %s6
  loop: start=0, step=1, limit=4
  $region2: #{tpu_custom_call.1} parent=0 // loop_pre_header
    _
  $region3: #{tpu_custom_call.1} parent=0 // loop_header
    %s11 = sphi 0, %s15
    %p12 = scmp.ge.s32.totalorder %s11, 4
    %s18 = sphi 0, %s30
    %s19 = sphi 0, %s26
    %s20 = sphi 0, %s18
    %s21 = sphi 0, %s19
    %s22 = sphi 0, %s20
    %s23 = sphi 0, %s21
    %s35 = sphi 0, %s37
    %s38 = sphi 0, %s35
    %s39 = sphi 0, %s38
    %s55 = sphi 0, %s39
    %s61 = sphi 0, %s63
    %s64 = sphi 0, %s61
    %s65 = sphi 0, %s64
    %s81 = sphi 0, %s65
    %s85 = sphi 0, %s85
    %s87 = sphi 0, %s85
    %s88 = sphi 0, %s87
    %s102 = sphi 0, %s88
    %s106 = sphi 0, %s106
    %s108 = sphi 0, %s106
    %s109 = sphi 0, %s108
    %s123 = sphi 0, %s109
    %s127 = sphi 0, %s127
    %s129 = sphi 0, %s127
    %s130 = sphi 0, %s129
    %s144 = sphi 0, %s130
    %s152 = sphi 0, %s154
    %s155 = sphi 0, %s152
    %s156 = sphi 0, %s155
    %s172 = sphi 0, %s156
  $region4: #{tpu_custom_call.1} parent=0 // loop_header_branch
    %14 = sbr.rel (%p12) target = $region8
  $region5: #{tpu_custom_call.1} parent=0 // loop_body
    %s16 = ssub.s32 %s11, 1
    %s17 = ssub.s32 %s11, 2
    %s24 = sadd.s32 1, %s19
    %p25 = scmp.ge.s32.totalorder %s24, 1
    %s26 = scalar_select %p25, 0, %s24
    %s27 = sadd.s32 1, %s18
    %s28 = scalar_select %p25, %s27, %s18
    %p29 = scmp.ge.s32.totalorder %s28, 2
    %s30 = scalar_select %p29, 0, %s28
    %s31 = ssub.s32 %s18, %s30
    %s32 = ssub.s32 %s19, %s26
    %s33 = sor.u32 %s31, %s32
    %p34 = scmp.eq.s32.totalorder %s33, 0
    %s36 = sadd.s32 %s35, 1
    %s37 = scalar_select %p34, %s35, %s36
    %p40 = pneg %p34
    %p41 = scmp.eq.s32.totalorder %s11, 1
    %p42 = por %p40, %p41
    %p43 = scmp.ne.s32.totalorder %s35, %s38
    %p44 = scmp.eq.s32.totalorder %s11, 0
    %p45 = por %p43, %p44
    %p46 = scmp.ne.s32.totalorder %s35, %s38
    %p47 = scmp.eq.s32.totalorder %s16, 1
    %p48 = por %p46, %p47
    %p49 = scmp.ne.s32.totalorder %s38, %s39
    %p50 = scmp.eq.s32.totalorder %s16, 0
    %p51 = por %p49, %p50
    %p52 = scmp.ne.s32.totalorder %s38, %s39
    %p53 = scmp.eq.s32.totalorder %s17, 1
    %p54 = por %p52, %p53
    %p56 = scmp.ne.s32.totalorder %s39, %s55
    %p57 = scmp.eq.s32.totalorder %s17, 0
    %p58 = por %p56, %p57
    %s59 = ssub.s32 %s19, %s26
    %p60 = scmp.eq.s32.totalorder %s59, 0
    %s62 = sadd.s32 %s61, 1
    %s63 = scalar_select %p60, %s61, %s62
    %p66 = pneg %p60
    %p67 = scmp.eq.s32.totalorder %s11, 1
    %p68 = por %p66, %p67
    %p69 = scmp.ne.s32.totalorder %s61, %s64
    %p70 = scmp.eq.s32.totalorder %s11, 0
    %p71 = por %p69, %p70
    %p72 = scmp.ne.s32.totalorder %s61, %s64
    %p73 = scmp.eq.s32.totalorder %s16, 1
    %p74 = por %p72, %p73
    %p75 = scmp.ne.s32.totalorder %s64, %s65
    %p76 = scmp.eq.s32.totalorder %s16, 0
    %p77 = por %p75, %p76
    %p78 = scmp.ne.s32.totalorder %s64, %s65
    %p79 = scmp.eq.s32.totalorder %s17, 1
    %p80 = por %p78, %p79
    %p82 = scmp.ne.s32.totalorder %s65, %s81
    %p83 = scmp.eq.s32.totalorder %s17, 0
    %p84 = por %p82, %p83
    %s86 = sadd.s32 %s85, 1
    %p89 = scmp.eq.s32.totalorder %s11, 1
    %p90 = scmp.ne.s32.totalorder %s85, %s87
    %p91 = scmp.eq.s32.totalorder %s11, 0
    %p92 = por %p90, %p91
    %p93 = scmp.ne.s32.totalorder %s85, %s87
    %p94 = scmp.eq.s32.totalorder %s16, 1
    %p95 = por %p93, %p94
    %p96 = scmp.ne.s32.totalorder %s87, %s88
    %p97 = scmp.eq.s32.totalorder %s16, 0
    %p98 = por %p96, %p97
    %p99 = scmp.ne.s32.totalorder %s87, %s88
    %p100 = scmp.eq.s32.totalorder %s17, 1
    %p101 = por %p99, %p100
    %p103 = scmp.ne.s32.totalorder %s88, %s102
    %p104 = scmp.eq.s32.totalorder %s17, 0
    %p105 = por %p103, %p104
    %s107 = sadd.s32 %s106, 1
    %p110 = scmp.eq.s32.totalorder %s11, 1
    %p111 = scmp.ne.s32.totalorder %s106, %s108
    %p112 = scmp.eq.s32.totalorder %s11, 0
    %p113 = por %p111, %p112
    %p114 = scmp.ne.s32.totalorder %s106, %s108
    %p115 = scmp.eq.s32.totalorder %s16, 1
    %p116 = por %p114, %p115
    %p117 = scmp.ne.s32.totalorder %s108, %s109
    %p118 = scmp.eq.s32.totalorder %s16, 0
    %p119 = por %p117, %p118
    %p120 = scmp.ne.s32.totalorder %s108, %s109
    %p121 = scmp.eq.s32.totalorder %s17, 1
    %p122 = por %p120, %p121
    %p124 = scmp.ne.s32.totalorder %s109, %s123
    %p125 = scmp.eq.s32.totalorder %s17, 0
    %p126 = por %p124, %p125
    %s128 = sadd.s32 %s127, 1
    %p131 = scmp.eq.s32.totalorder %s11, 1
    %p132 = scmp.ne.s32.totalorder %s127, %s129
    %p133 = scmp.eq.s32.totalorder %s11, 0
    %p134 = por %p132, %p133
    %p135 = scmp.ne.s32.totalorder %s127, %s129
    %p136 = scmp.eq.s32.totalorder %s16, 1
    %p137 = por %p135, %p136
    %p138 = scmp.ne.s32.totalorder %s129, %s130
    %p139 = scmp.eq.s32.totalorder %s16, 0
    %p140 = por %p138, %p139
    %p141 = scmp.ne.s32.totalorder %s129, %s130
    %p142 = scmp.eq.s32.totalorder %s17, 1
    %p143 = por %p141, %p142
    %p145 = scmp.ne.s32.totalorder %s130, %s144
    %p146 = scmp.eq.s32.totalorder %s17, 0
    %p147 = por %p145, %p146
    %s148 = ssub.s32 %s18, %s30
    %s149 = ssub.s32 %s19, %s26
    %s150 = sor.u32 %s148, %s149
    %p151 = scmp.eq.s32.totalorder %s150, 0
    %s153 = sadd.s32 %s152, 1
    %s154 = scalar_select %p151, %s152, %s153
    %p157 = pneg %p151
    %p158 = scmp.eq.s32.totalorder %s11, 1
    %p159 = por %p157, %p158
    %p160 = scmp.ne.s32.totalorder %s152, %s155
    %p161 = scmp.eq.s32.totalorder %s11, 0
    %p162 = por %p160, %p161
    %p163 = scmp.ne.s32.totalorder %s152, %s155
    %p164 = scmp.eq.s32.totalorder %s16, 1
    %p165 = por %p163, %p164
    %p166 = scmp.ne.s32.totalorder %s155, %s156
    %p167 = scmp.eq.s32.totalorder %s16, 0
    %p168 = por %p166, %p167
    %p169 = scmp.ne.s32.totalorder %s155, %s156
    %p170 = scmp.eq.s32.totalorder %s17, 1
    %p171 = por %p169, %p170
    %p173 = scmp.ne.s32.totalorder %s156, %s172
    %p174 = scmp.eq.s32.totalorder %s17, 0
    %p175 = por %p173, %p174
    %p176 = scmp.le.s32.totalorder 1, %s11
    %p177 = scmp.lt.s32.totalorder %s11, 3
    %p178 = pnand %p176, %p177
    %p179 = pneg %p178
    // Predicated region
    $region9: #{tpu_custom_call.1} parent=5 // pred_check
      _
    $region10: #{tpu_custom_call.1} parent=5 // pred_check_branch
      %181 = sbr.rel (%p178) target = $region12
    $region11: #{tpu_custom_call.1} parent=5 // pred_region
      %s182 = ssub.s32 %s11, 1
      // Predicated region
      $region13: #{tpu_custom_call.1} parent=11 // pred_check
        %p183 = pneg %p77
      $region14: #{tpu_custom_call.1} parent=11 // pred_check_branch
        %185 = sbr.rel (%p183) target = $region16
      $region15: #{tpu_custom_call.1} parent=11 // pred_region
        %p186 = scmp.lt.s32.totalorder %s21, 0
        %s187 = scalar_select %p186, %s21, 0
        %s188 = smul.addr %s187, 8
        %s189 = scalar_lea.vmem %s1, %s188
      $region16: #{tpu_custom_call.1} parent=11 // pred_fallthru
        _
      // Predicated region
      $region17: #{tpu_custom_call.1} parent=11 // pred_check
        %p190 = pneg %p98
      $region18: #{tpu_custom_call.1} parent=11 // pred_check_branch
        %192 = sbr.rel (%p190) target = $region20
      $region19: #{tpu_custom_call.1} parent=11 // pred_region
        _
      $region20: #{tpu_custom_call.1} parent=11 // pred_fallthru
        _
      // Predicated region
      $region21: #{tpu_custom_call.1} parent=11 // pred_check
        %p193 = pneg %p119
      $region22: #{tpu_custom_call.1} parent=11 // pred_check_branch
        %195 = sbr.rel (%p193) target = $region24
      $region23: #{tpu_custom_call.1} parent=11 // pred_region
        _
      $region24: #{tpu_custom_call.1} parent=11 // pred_fallthru
        _
      // Predicated region
      $region25: #{tpu_custom_call.1} parent=11 // pred_check
        %p196 = pneg %p140
      $region26: #{tpu_custom_call.1} parent=11 // pred_check_branch
        %198 = sbr.rel (%p196) target = $region28
      $region27: #{tpu_custom_call.1} parent=11 // pred_region
        _
      $region28: #{tpu_custom_call.1} parent=11 // pred_fallthru
        _
    $region12: #{tpu_custom_call.1} parent=5 // pred_fallthru
      _
    %p199 = scmp.lt.s32.totalorder %s11, 2
    // Predicated region
    $region29: #{tpu_custom_call.1} parent=5 // pred_check
      %p200 = pneg %p199
    $region30: #{tpu_custom_call.1} parent=5 // pred_check_branch
      %202 = sbr.rel (%p200) target = $region32
    $region31: #{tpu_custom_call.1} parent=5 // pred_region
      // Predicated region
      $region33: #{tpu_custom_call.1} parent=31 // pred_check
        %p203 = pneg %p45
      $region34: #{tpu_custom_call.1} parent=31 // pred_check_branch
        %205 = sbr.rel (%p203) target = $region36
      $region35: #{tpu_custom_call.1} parent=31 // pred_region
        %p206 = scmp.lt.s32.totalorder %s18, 1
        %s207 = scalar_select %p206, %s18, 1
        %p208 = scmp.lt.s32.totalorder %s19, 0
        %s209 = scalar_select %p208, %s19, 0
        %s210 = sadd.s32 %s209, %s207
        %s211 = smul.addr %s210, 8
        %s212 = scalar_lea.vmem %s0, %s211
      $region36: #{tpu_custom_call.1} parent=31 // pred_fallthru
        _
    $region32: #{tpu_custom_call.1} parent=5 // pred_fallthru
      _
    %p213 = scmp.le.s32.totalorder 1, %s11
    %p214 = scmp.lt.s32.totalorder %s11, 3
    %p215 = pnand %p213, %p214
    %p216 = pneg %p215
    // Predicated region
    $region37: #{tpu_custom_call.1} parent=5 // pred_check
      _
    $region38: #{tpu_custom_call.1} parent=5 // pred_check_branch
      %218 = sbr.rel (%p215) target = $region40
    $region39: #{tpu_custom_call.1} parent=5 // pred_region
      %s219 = ssub.s32 %s11, 1
      %p220 = scmp.lt.s32.totalorder %s20, 1
      %s221 = scalar_select %p220, %s20, 1
      %p222 = scmp.lt.s32.totalorder %s21, 0
      %s223 = scalar_select %p222, %s21, 0
      %s224 = sadd.s32 %s223, %s221
      %s225 = smul.addr %s224, 8
      %s226 = scalar_lea.vmem %s0, %s225
      %p227 = pneg %p51
      %p228 = pneg %p48
      %p229 = scmp.lt.s32.totalorder %s21, 0
      %s230 = scalar_select %p229, %s21, 0
      %s231 = smul.addr %s230, 8
      %s232 = scalar_lea.vmem %s1, %s231
      %p233 = pneg %p77
      %p234 = pneg %p74
      %p235 = pneg %p98
      %p236 = pneg %p95
      %p237 = pneg %p119
      %p238 = pneg %p116
      %p239 = pneg %p140
      %p240 = pneg %p137
      %p241 = pneg %p168
      %p242 = pneg %p165
      %p243 = scmp.lt.s32.totalorder %s20, 1
      %s244 = scalar_select %p243, %s20, 1
      %p245 = scmp.lt.s32.totalorder %s21, 0
      %s246 = scalar_select %p245, %s21, 0
      %s247 = sadd.s32 %s246, %s244
      %s248 = smul.addr %s247, 8
      %s249 = scalar_lea.vmem %s5, %s248
      %p250 = scmp.lt.s32.totalorder %s20, 1
      %s251 = scalar_select %p250, %s20, 1
      %p252 = scmp.lt.s32.totalorder %s21, 0
      %s253 = scalar_select %p252, %s21, 0
      %s254 = sadd.s32 %s253, %s251
      %s255 = smul.addr %s254, 8
      %s256 = scalar_lea.vmem %s0, %s255
      %p257 = scmp.lt.s32.totalorder %s21, 0
      %s258 = scalar_select %p257, %s21, 0
      %s259 = smul.addr %s258, 8
      %s260 = scalar_lea.vmem %s1, %s259
      %p261 = scmp.lt.s32.totalorder %s20, 1
      %s262 = scalar_select %p261, %s20, 1
      %p263 = scmp.lt.s32.totalorder %s21, 0
      %s264 = scalar_select %p263, %s21, 0
      %s265 = sadd.s32 %s264, %s262
      %s266 = smul.addr %s265, 8
      %s267 = scalar_lea.vmem %s5, %s266
      %v268 = vld [vmem:[%s256] sm:$0xff]
      %v269 = vld [vmem:[%s2] sm:$0xf]
      %v270 = vld [vmem:[%s260] sm:$0xff]
      %vm271 = vcmask 31744
      %v273 = vsel %vm271, %v268, 0
      %vm275 = vcmask 1043456
      %v277 = vsel %vm275, %v269, 0
      %279 = vmatprep.subr.mxu0 0.0
      %280 = vmatpush1.msra.mxu0 0.0
      %281 = vmatprep.subr.mxu0 0.0
      %282 = vmatpush1.msra.mxu0 0.0
      %283 = vmatprep.subr.mxu0 0.0
      %284 = vmatpush1.msra.mxu0 0.0
      %285 = vmatprep.subr.mxu0 0.0
      %286 = vmatpush1.msra.mxu0 0.0
      %287 = vmatprep.subr.mxu0 0.0
      %288 = vmatpush1.msra.mxu0 0.0
      %289 = vmatprep.subr.mxu0 0.0
      %290 = vmatpush1.msra.mxu0 0.0
      %291 = vmatprep.subr.mxu0 0.0
      %292 = vmatpush1.msra.mxu0 0.0
      %293 = vmatprep.subr.mxu0 0.0
      %294 = vmatpush1.msra.mxu0 0.0
      %295 = vmatprep.subr.mxu0 0.0
      %296 = vmatpush1.msra.mxu0 0.0
      %297 = vmatprep.subr.mxu0 0.0
      %298 = vmatpush1.msra.mxu0 0.0
      %299 = vmatprep.subr.mxu0 0.0
      %300 = vmatpush1.msra.mxu0 0.0
      %301 = vmatprep.subr.mxu0 0.0
      %302 = vmatpush1.msra.mxu0 0.0
      %303 = vmatprep.subr.mxu0 0.0
      %304 = vmatpush1.msra.mxu0 0.0
      %305 = vmatprep.subr.mxu0 0.0
      %306 = vmatpush1.msra.mxu0 0.0
      %307 = vmatprep.subr.mxu0 0.0
      %308 = vmatpush1.msra.mxu0 0.0
      %309 = vmatprep.subr.mxu0 0.0
      %310 = vmatpush1.msra.mxu0 %v277
      %311 = vmatprep.subr.mxu0 0.0
      %312 = vmatpush2.msra.mxu0 0.0
      %313 = vmatprep.subr.mxu0 0.0
      %314 = vmatpush2.msra.mxu0 0.0
      %315 = vmatprep.subr.mxu0 0.0
      %316 = vmatpush2.msra.mxu0 0.0
      %317 = vmatprep.subr.mxu0 0.0
      %318 = vmatpush2.msra.mxu0 0.0
      %319 = vmatprep.subr.mxu0 0.0
      %320 = vmatpush2.msra.mxu0 0.0
      %321 = vmatprep.subr.mxu0 0.0
      %322 = vmatpush2.msra.mxu0 0.0
      %323 = vmatprep.subr.mxu0 0.0
      %324 = vmatpush2.msra.mxu0 0.0
      %325 = vmatprep.subr.mxu0 0.0
      %326 = vmatpush2.msra.mxu0 0.0
      %327 = vmatprep.subr.mxu0 0.0
      %328 = vmatpush2.msra.mxu0 0.0
      %329 = vmatprep.subr.mxu0 0.0
      %330 = vmatpush2.msra.mxu0 0.0
      %331 = vmatprep.subr.mxu0 0.0
      %332 = vmatpush2.msra.mxu0 0.0
      %333 = vmatprep.subr.mxu0 0.0
      %334 = vmatpush2.msra.mxu0 0.0
      %335 = vmatprep.subr.mxu0 0.0
      %336 = vmatpush2.msra.mxu0 0.0
      %337 = vmatprep.subr.mxu0 0.0
      %338 = vmatpush2.msra.mxu0 0.0
      %339 = vmatprep.subr.mxu0 0.0
      %340 = vmatpush2.msra.mxu0 0.0
      %341 = vmatprep.subr.mxu0 0.0
      %342 = vmatpush2.msra.mxu0 0.0
      %343 = vmatprep.mubr.f32.mxu0 0.0
      %344 = vmatmul.mubr.f32.gmra.mxu0 %v273
      %v345 = vpop.f32.mrf.mxu0
      %v346 = vadd.f32 %v270, %v345
      %v347 = vpop.f32.mrf.mxu0
      %348 = vdwg.mxu0
      %v349 = vld [vmem:[%s3] sm:$0xff]
      %v350 = vld [vmem:[%s3 + $0x8] sm:$0xff]
      %v351 = vld [vmem:[%s3 + $0x10] sm:$0xff]
      %v352 = vld [vmem:[%s3 + $0x18] sm:$0xff]
      %v353 = vld [vmem:[%s4] sm:$0x1]
      %vm354 = vcmask 261120
      %v355 = vsel %vm354, %v346, 0.0
      %356 = vadd.xlane.f32.xlu0 %v355
      %v357 = vpop.xlane.xlu0 %356
      %v358 = vrcp.pop 32.0
      %v359 = vmul.f32 %v357, %v358
      %v360 = vsub.f32 %v346, %v359
      %v361 = vmul.f32 %v360, %v360
      %v362 = vsel %vm354, %v361, 0.0
      %363 = vadd.xlane.f32.xlu0 %v362
      %v364 = vpop.xlane.xlu0 %363
      %v365 = vmul.f32 %v364, %v358
      %v366 = vadd.f32 %v365, 1e-05
      %v367 = vrsqrt.pop %v366
      %v368 = vmul.f32 %v360, %v367
      %v370 = vlaneseq
      %v371 = vshrl.u32 %v370, 7
      %v372 = vsub.s32 0, %v371
      %v373 = vrot.slane %v353, %v372
      %v376 = vsel %vm354, %v368, 0
      %378 = vmatprep.subr.mxu0 0.0
      %379 = vmatpush1.msra.mxu0 0.0
      %380 = vmatprep.subr.mxu0 0.0
      %381 = vmatpush1.msra.mxu0 0.0
      %382 = vmatprep.subr.mxu0 0.0
      %383 = vmatpush1.msra.mxu0 0.0
      %384 = vmatprep.subr.mxu0 0.0
      %385 = vmatpush1.msra.mxu0 0.0
      %386 = vmatprep.subr.mxu0 0.0
      %387 = vmatpush1.msra.mxu0 0.0
      %388 = vmatprep.subr.mxu0 0.0
      %389 = vmatpush1.msra.mxu0 0.0
      %390 = vmatprep.subr.mxu0 0.0
      %391 = vmatpush1.msra.mxu0 0.0
      %392 = vmatprep.subr.mxu0 0.0
      %393 = vmatpush1.msra.mxu0 0.0
      %394 = vmatprep.subr.mxu0 0.0
      %395 = vmatpush1.msra.mxu0 0.0
      %396 = vmatprep.subr.mxu0 0.0
      %397 = vmatpush1.msra.mxu0 0.0
      %398 = vmatprep.subr.mxu0 0.0
      %399 = vmatpush1.msra.mxu0 0.0
      %400 = vmatprep.subr.mxu0 0.0
      %401 = vmatpush1.msra.mxu0 0.0
      %402 = vmatprep.subr.mxu0 0.0
      %403 = vmatpush1.msra.mxu0 %v352
      %404 = vmatprep.subr.mxu0 0.0
      %405 = vmatpush1.msra.mxu0 %v351
      %406 = vmatprep.subr.mxu0 0.0
      %407 = vmatpush1.msra.mxu0 %v350
      %408 = vmatprep.subr.mxu0 0.0
      %409 = vmatpush1.msra.mxu0 %v349
      %410 = vmatprep.subr.mxu0 0.0
      %411 = vmatpush2.msra.mxu0 0.0
      %412 = vmatprep.subr.mxu0 0.0
      %413 = vmatpush2.msra.mxu0 0.0
      %414 = vmatprep.subr.mxu0 0.0
      %415 = vmatpush2.msra.mxu0 0.0
      %416 = vmatprep.subr.mxu0 0.0
      %417 = vmatpush2.msra.mxu0 0.0
      %418 = vmatprep.subr.mxu0 0.0
      %419 = vmatpush2.msra.mxu0 0.0
      %420 = vmatprep.subr.mxu0 0.0
      %421 = vmatpush2.msra.mxu0 0.0
      %422 = vmatprep.subr.mxu0 0.0
      %423 = vmatpush2.msra.mxu0 0.0
      %424 = vmatprep.subr.mxu0 0.0
      %425 = vmatpush2.msra.mxu0 0.0
      %426 = vmatprep.subr.mxu0 0.0
      %427 = vmatpush2.msra.mxu0 0.0
      %428 = vmatprep.subr.mxu0 0.0
      %429 = vmatpush2.msra.mxu0 0.0
      %430 = vmatprep.subr.mxu0 0.0
      %431 = vmatpush2.msra.mxu0 0.0
      %432 = vmatprep.subr.mxu0 0.0
      %433 = vmatpush2.msra.mxu0 0.0
      %434 = vmatprep.subr.mxu0 0.0
      %435 = vmatpush2.msra.mxu0 0.0
      %436 = vmatprep.subr.mxu0 0.0
      %437 = vmatpush2.msra.mxu0 0.0
      %438 = vmatprep.subr.mxu0 0.0
      %439 = vmatpush2.msra.mxu0 0.0
      %440 = vmatprep.subr.mxu0 0.0
      %441 = vmatpush2.msra.mxu0 0.0
      %442 = vmatprep.mubr.f32.mxu0 0.0
      %443 = vmatmul.mubr.f32.gmra.mxu0 %v376
      %v444 = vpop.f32.mrf.mxu0
      %v445 = vadd.f32 %v373, %v444
      %v446 = vpop.f32.mrf.mxu0
      %447 = vdwg.mxu0
      %448 = vst.msk [vmem:[%s267] sm:$0xff] %vm271, %v445
      %p449 = scmp.lt.s32.totalorder %s20, 1
      %s450 = scalar_select %p449, %s20, 1
      %p451 = scmp.lt.s32.totalorder %s21, 0
      %s452 = scalar_select %p451, %s21, 0
      %s453 = sadd.s32 %s452, %s450
      %s454 = smul.addr %s453, 8
      %s455 = scalar_lea.vmem %s5, %s454
      // Predicated region
      $region41: #{tpu_custom_call.1} parent=39 // pred_check
        %p456 = pneg %p165
      $region42: #{tpu_custom_call.1} parent=39 // pred_check_branch
        %458 = sbr.rel (%p456) target = $region44
      $region43: #{tpu_custom_call.1} parent=39 // pred_region
        _
      $region44: #{tpu_custom_call.1} parent=39 // pred_fallthru
        _
    $region40: #{tpu_custom_call.1} parent=5 // pred_fallthru
      _
    %p459 = scmp.le.s32.totalorder 2, %s11
    // Predicated region
    $region45: #{tpu_custom_call.1} parent=5 // pred_check
      %p460 = pneg %p459
    $region46: #{tpu_custom_call.1} parent=5 // pred_check_branch
      %462 = sbr.rel (%p460) target = $region48
    $region47: #{tpu_custom_call.1} parent=5 // pred_region
      %s463 = ssub.s32 %s11, 2
      // Predicated region
      $region49: #{tpu_custom_call.1} parent=47 // pred_check
        %p464 = pneg %p171
      $region50: #{tpu_custom_call.1} parent=47 // pred_check_branch
        %466 = sbr.rel (%p464) target = $region52
      $region51: #{tpu_custom_call.1} parent=47 // pred_region
        %p467 = scmp.lt.s32.totalorder %s22, 1
        %s468 = scalar_select %p467, %s22, 1
        %p469 = scmp.lt.s32.totalorder %s23, 0
        %s470 = scalar_select %p469, %s23, 0
        %s471 = sadd.s32 %s470, %s468
        %s472 = smul.addr %s471, 8
        %s473 = scalar_lea.vmem %s5, %s472
      $region52: #{tpu_custom_call.1} parent=47 // pred_fallthru
        _
    $region48: #{tpu_custom_call.1} parent=5 // pred_fallthru
      _
  $region6: #{tpu_custom_call.1} parent=0 // loop_footer
    %s15 = sadd.s32 1, %s11
  $region7: #{tpu_custom_call.1} parent=0 // loop_footer_branch
    %10 = sbr.rel target = $region3
  $region8: #{tpu_custom_call.1} parent=0 // loop_exit
    _

</llo_original>
